<compile_context>
chip_gen: v7x
topology: tpu7x:2x2x1
jax: 0.10.0
libtpu: 0.0.40
codegen_flags: <defaults>
</compile_context>

<pallas_src>
import math

import jax
import jax.numpy as jnp
from jax.experimental import pallas as pl
from jax.experimental.pallas import tpu as pltpu


_INV_SQRT2 = 1.0 / math.sqrt(2.0)


def _round_up(x, m):
    return ((x + m - 1) // m) * m


def _cdiv(a, b):
    return (a + b - 1) // b


def _gelu_exact(x):
    # torch.nn.GELU() default: exact erf formulation, evaluated in f32.
    # (tanh-approx GELU would move work VALU->EUP on v6e/v7x at a small
    #  accuracy delta; kept exact for parity with the PyTorch module.)
    return 0.5 * x * (1.0 + jax.lax.erf(x * _INV_SQRT2))


# ---------------------------------------------------------------------------
# Kernel bodies
# ---------------------------------------------------------------------------

def _mlp_kernel(x_ref, w1_ref, b1_ref, w2_ref, b2_ref, o_ref):
    """Full-hidden kernel: grid over row tiles only; W1/W2 fully resident."""
    h = jnp.dot(x_ref[...], w1_ref[...], preferred_element_type=jnp.float32)
    h = _gelu_exact(h + b1_ref[...])
    # TODO(synk): training-mode Dropout(0.1) omitted (inference identity).
    out = jnp.dot(h.astype(w2_ref.dtype), w2_ref[...],
                  preferred_element_type=jnp.float32)
    o_ref[...] = (out + b2_ref[...]).astype(o_ref.dtype)


def _mlp_kernel_coltiled(x_ref, w1_ref, b1_ref, w2_ref, b2_ref, o_ref, h_ref):
    """Column-tiled kernel for large hidden_dim: grid = (row tiles, W2 col tiles).

    h = GELU(x @ W1 + b1) is computed once per row tile (at j == 0) into a
    VMEM scratch and reused across W2 column tiles, so W2 is never fully
    resident (keeps the working set inside v7x's 64 MiB VMEM).
    """
    @pl.when(pl.program_id(1) == 0)
    def _():
        h = jnp.dot(x_ref[...], w1_ref[...], preferred_element_type=jnp.float32)
        h_ref[...] = _gelu_exact(h + b1_ref[...]).astype(h_ref.dtype)

    out = jnp.dot(h_ref[...], w2_ref[...], preferred_element_type=jnp.float32)
    o_ref[...] = (out + b2_ref[...]).astype(o_ref.dtype)


# ---------------------------------------------------------------------------
# Wrapper
# ---------------------------------------------------------------------------

def _choose_row_tiling(M, tile_m):
    """Row tile `tm`, padded row count `Mp`, and grid size.

    Guarantees >= 2 grid steps whenever M > 8 (so a "parallel" row axis can be
    split across both v7x TensorCores) and bounds padded-row waste by padding
    M to a small quantum (256 rows, or 8 for tiny inputs) with tm | Mp.
    """
    tm_cap = max(8, min(tile_m, _round_up(_cdiv(M, 2), 8)))
    q = 256 if tm_cap >= 256 else 8
    Mp = _round_up(M, q)
    tm = max(q, tm_cap - (tm_cap % q))
    while Mp % tm:
        tm -= q
    return tm, Mp, Mp // tm


def _vmem_limit_bytes():
    cap = None
    try:
        cap = int(pltpu.get_tpu_info().vmem_capacity_bytes)
    except Exception:
        cap = None
    if not cap or cap <= 0:
        cap = 128 * 1024 * 1024  # v5e / v6e physical VMEM
    # ~15% headroom for Mosaic internal scratch (f32 h / GELU temporaries);
    # never below 32 MiB, never above ~110 MiB.
    return max(32 * 1024 * 1024, min(int(cap * 0.85), 110 * 1024 * 1024))


def text_network_forward(word_input, w1, b1, w2, b2, *,
                         tile_m=512, compute_dtype=jnp.bfloat16):
    """word_input: (B, S, word_dim) -> (B, S, hidden_dim) in word_input.dtype.

    Weights are stored as (in_features, out_features), i.e. the transpose of
    PyTorch's nn.Linear weight, so the kernel computes x @ W + b.
    """
    B, S, word_dim = word_input.shape
    hidden_dim = w1.shape[1]
    M = B * S
    out_dtype = word_input.dtype

    # Lane-dense output: pad hidden to a multiple of 128 (exact: GELU(0)=0 and
    # the padded W2 rows/cols and bias entries are zero).  word_dim is NOT
    # padded -- x keeps its native K so no padded x copy is materialized.
    Hp = _round_up(hidden_dim, 128)

    tm, Mp, grid_m = _choose_row_tiling(M, tile_m)

    # Column-tile W2 only when hidden is large; otherwise keep it resident.
    if Hp <= 1024:
        tn, grid_n = Hp, 1
    else:
        tn = next(c for c in (1024, 512, 256, 128) if Hp % c == 0)
        grid_n = Hp // tn

    x2d = word_input.reshape(M, word_dim)
    if Mp != M:
        x2d = jnp.pad(x2d, ((0, Mp - M), (0, 0)))
    if x2d.dtype != compute_dtype:
        x2d = x2d.astype(compute_dtype)

    dh = Hp - hidden_dim
    w1p = (jnp.pad(w1, ((0, 0), (0, dh))) if dh else w1).astype(compute_dtype)
    w2p = (jnp.pad(w2, ((0, dh), (0, dh))) if dh else w2).astype(compute_dtype)
    b1p = (jnp.pad(b1, (0, dh)) if dh else b1).reshape(1, Hp).astype(jnp.float32)
    b2p = (jnp.pad(b2, (0, dh)) if dh else b2).reshape(1, Hp).astype(jnp.float32)

    in_bytes = jnp.dtype(compute_dtype).itemsize
    out_bytes = jnp.dtype(out_dtype).itemsize
    cost = pl.CostEstimate(
        flops=2 * Mp * word_dim * Hp + 2 * Mp * Hp * Hp,
        transcendentals=Mp * Hp,
        bytes_accessed=(Mp * word_dim + word_dim * Hp + Hp * Hp) * in_bytes
                       + 2 * Hp * 4 + Mp * Hp * out_bytes,
    )

    resident = pl.Buffered(1)  # constant blocks: double-buffering buys nothing
    compiler = dict(vmem_limit_bytes=_vmem_limit_bytes())

    if grid_n == 1:
        grid = (grid_m,)
        in_specs = [
            pl.BlockSpec((tm, word_dim), lambda i: (i, 0)),                      # x rows
            pl.BlockSpec((word_dim, Hp), lambda i: (0, 0), pipeline_mode=resident),  # W1
            pl.BlockSpec((1, Hp), lambda i: (0, 0), pipeline_mode=resident),         # b1
            pl.BlockSpec((Hp, Hp), lambda i: (0, 0), pipeline_mode=resident),         # W2
            pl.BlockSpec((1, Hp), lambda i: (0, 0), pipeline_mode=resident),          # b2
        ]
        out_specs = pl.BlockSpec((tm, Hp), lambda i: (i, 0))
        scratch = []
        kernel = _mlp_kernel
        compiler["dimension_semantics"] = ("parallel",)
    else:
        grid = (grid_m, grid_n)
        in_specs = [
            pl.BlockSpec((tm, word_dim), lambda i, j: (i, 0)),                        # x rows
            pl.BlockSpec((word_dim, Hp), lambda i, j: (0, 0), pipeline_mode=resident),  # W1
            pl.BlockSpec((1, Hp), lambda i, j: (0, 0), pipeline_mode=resident),          # b1
            pl.BlockSpec((Hp, tn), lambda i, j: (0, j)),                               # W2 col tile
            pl.BlockSpec((1, tn), lambda i, j: (0, j)),                                # b2 col tile
        ]
        out_specs = pl.BlockSpec((tm, tn), lambda i, j: (i, j))
        scratch = [pltpu.VMEM((tm, Hp), compute_dtype)]  # cached h per row tile
        kernel = _mlp_kernel_coltiled
        # j carries the h-scratch dependence -> must stay sequential on a core.
        compiler["dimension_semantics"] = ("parallel", "arbitrary")

    out2d = pl.pallas_call(
        kernel,
        out_shape=jax.ShapeDtypeStruct((Mp, Hp), out_dtype),
        grid_spec=pltpu.PrefetchScalarGridSpec(
            num_scalar_prefetch=0,
            grid=grid,
            in_specs=in_specs,
            out_specs=out_specs,
            scratch_shapes=scratch,
        ),
        compiler_params=pltpu.CompilerParams(**compiler),
        cost_estimate=cost,
    )(x2d, w1p, b1p, w2p, b2p)

    # Slice off row / lane padding (padded rows are never consumed).
    return out2d[:M, :hidden_dim].reshape(B, S, hidden_dim)


def init_params(key, word_dim, hidden_dim):
    """Deterministic parameter init mirroring nn.Linear shapes (transposed weights)."""
    k1, k2, k3, k4 = jax.random.split(key, 4)
    lim1 = 1.0 / math.sqrt(word_dim)
    lim2 = 1.0 / math.sqrt(hidden_dim)
    w1 = jax.random.uniform(k1, (word_dim, hidden_dim), jnp.float32, -lim1, lim1)
    b1 = jax.random.uniform(k2, (hidden_dim,), jnp.float32, -lim1, lim1)
    w2 = jax.random.uniform(k3, (hidden_dim, hidden_dim), jnp.float32, -lim2, lim2)
    b2 = jax.random.uniform(k4, (hidden_dim,), jnp.float32, -lim2, lim2)
    return w1, b1, w2, b2


if __name__ == "__main__":
    word_dim, hidden_dim = 32, 32
    B, S = 2, 8  # 16 rows total

    key = jax.random.PRNGKey(0)
    kx, kp = jax.random.split(key)
    word_input = jax.random.normal(kx, (B, S, word_dim), jnp.float32)
    w1, b1, w2, b2 = init_params(kp, word_dim, hidden_dim)

    out = text_network_forward(word_input, w1, b1, w2, b2)
    out = jax.block_until_ready(out)
    assert out.shape == (B, S, hidden_dim)
    assert out.dtype == word_input.dtype

    # Reference mirroring the kernel's bf16-input / f32-accumulate path.
    def _bf16(a):
        return a.astype(jnp.bfloat16).astype(jnp.float32)

    h_ref = jnp.einsum("bsk,kh->bsh", _bf16(word_input), _bf16(w1)) + b1
    h_ref = 0.5 * h_ref * (1.0 + jax.lax.erf(h_ref * _INV_SQRT2))
    ref = jnp.einsum("bsh,hj->bsj", _bf16(h_ref), _bf16(w2)) + b2
    assert jnp.allclose(out, ref, atol=2e-3, rtol=2e-3), "mismatch vs bf16 reference"

    # Loose check against pure-f32 PyTorch-equivalent math (bf16 matmul inputs
    # by design; pass compute_dtype=jnp.float32 for exact-f32 parity).
    h32 = word_input @ w1 + b1
    h32 = 0.5 * h32 * (1.0 + jax.lax.erf(h32 * _INV_SQRT2))
    ref32 = h32 @ w2 + b2
    assert jnp.allclose(out, ref32, atol=5e-2, rtol=5e-2), "mismatch vs f32 reference"

    print("KERNEL_OK")
</pallas_src>

<mosaic_0001>
module attributes {stable_mosaic.version = 11 : i64} {
  func.func @_mlp_kernel(%arg0: i32, %arg1: memref<8x32xbf16, #tpu.memory_space<vmem>>, %arg2: memref<32x128xbf16, #tpu.memory_space<vmem>>, %arg3: memref<1x128xf32, #tpu.memory_space<vmem>>, %arg4: memref<128x128xbf16, #tpu.memory_space<vmem>>, %arg5: memref<1x128xf32, #tpu.memory_space<vmem>>, %arg6: memref<8x128xf32, #tpu.memory_space<vmem>>) attributes {dimension_semantics = [#tpu.dimension_semantics<parallel>], iteration_bounds = array<i64: 2>, scalar_prefetch = 0 : i64, scratch_operands = 0 : i64, tpu.core_type = #tpu.core_type<tc>, window_params = [{transform_indices = @transform_0, window_bounds = array<i64: 8, 32>}, {pipeline_mode = #tpu.pipeline_mode<synchronous>, transform_indices = @transform_1, window_bounds = array<i64: 32, 128>}, {pipeline_mode = #tpu.pipeline_mode<synchronous>, transform_indices = @transform_2, window_bounds = array<i64: 1, 128>}, {pipeline_mode = #tpu.pipeline_mode<synchronous>, transform_indices = @transform_3, window_bounds = array<i64: 128, 128>}, {pipeline_mode = #tpu.pipeline_mode<synchronous>, transform_indices = @transform_4, window_bounds = array<i64: 1, 128>}, {transform_indices = @transform_5, window_bounds = array<i64: 8, 128>}]} {
    %c0 = arith.constant 0 : index
    %c0_0 = arith.constant 0 : index
    %0 = vector.load %arg1[%c0, %c0_0] : memref<8x32xbf16, #tpu.memory_space<vmem>>, vector<8x32xbf16>
    %c0_1 = arith.constant 0 : index
    %c0_2 = arith.constant 0 : index
    %1 = vector.load %arg2[%c0_1, %c0_2] : memref<32x128xbf16, #tpu.memory_space<vmem>>, vector<32x128xbf16>
    %cst = arith.constant dense<0.000000e+00> : vector<8x128xf32>
    %2 = tpu.matmul %0, %1, %cst {dimension_numbers = #tpu.dot_dimension_numbers<[1], [0], [0], [1], [0, 0, 1, 1], [], []>} : vector<8x32xbf16>, vector<32x128xbf16>, vector<8x128xf32> -> vector<8x128xf32>
    %c0_3 = arith.constant 0 : index
    %c0_4 = arith.constant 0 : index
    %3 = vector.load %arg3[%c0_3, %c0_4] : memref<1x128xf32, #tpu.memory_space<vmem>>, vector<1x128xf32>
    %4 = vector.broadcast %3 : vector<1x128xf32> to vector<8x128xf32>
    %5 = arith.addf %2, %4 : vector<8x128xf32>
    %cst_5 = arith.constant 5.000000e-01 : f32
    %6 = vector.broadcast %cst_5 : f32 to vector<8x128xf32>
    %7 = arith.mulf %6, %5 : vector<8x128xf32>
    %cst_6 = arith.constant 0.707106769 : f32
    %8 = vector.broadcast %cst_6 : f32 to vector<8x128xf32>
    %9 = arith.mulf %5, %8 : vector<8x128xf32>
    %10 = math.erf %9 : vector<8x128xf32>
    %cst_7 = arith.constant 1.000000e+00 : f32
    %11 = vector.broadcast %cst_7 : f32 to vector<8x128xf32>
    %12 = arith.addf %11, %10 : vector<8x128xf32>
    %13 = arith.mulf %7, %12 : vector<8x128xf32>
    %14 = arith.truncf %13 : vector<8x128xf32> to vector<8x128xbf16>
    %c0_8 = arith.constant 0 : index
    %c0_9 = arith.constant 0 : index
    %15 = vector.load %arg4[%c0_8, %c0_9] : memref<128x128xbf16, #tpu.memory_space<vmem>>, vector<128x128xbf16>
    %cst_10 = arith.constant dense<0.000000e+00> : vector<8x128xf32>
    %16 = tpu.matmul %14, %15, %cst_10 {dimension_numbers = #tpu.dot_dimension_numbers<[1], [0], [0], [1], [0, 0, 1, 1], [], []>} : vector<8x128xbf16>, vector<128x128xbf16>, vector<8x128xf32> -> vector<8x128xf32>
    %c0_11 = arith.constant 0 : index
    %c0_12 = arith.constant 0 : index
    %17 = vector.load %arg5[%c0_11, %c0_12] : memref<1x128xf32, #tpu.memory_space<vmem>>, vector<1x128xf32>
    %18 = vector.broadcast %17 : vector<1x128xf32> to vector<8x128xf32>
    %19 = arith.addf %16, %18 : vector<8x128xf32>
    %c0_13 = arith.constant 0 : index
    %c0_14 = arith.constant 0 : index
    %20 = vector.load %arg6[%c0_13, %c0_14] : memref<8x128xf32, #tpu.memory_space<vmem>>, vector<8x128xf32>
    tpu.vector_store %arg6[%c0_13, %c0_14], %19 {strides = array<i32>} : memref<8x128xf32, #tpu.memory_space<vmem>>, vector<8x128xf32>,
    return
  }
  func.func @transform_0(%arg0: i32) -> (i32, i32) {
    %c0_i32 = arith.constant 0 : i32
    %c0_i32_0 = arith.constant 0 : i32
    return %arg0, %c0_i32 : i32, i32
  }
  func.func @transform_1(%arg0: i32) -> (i32, i32) {
    %c0_i32 = arith.constant 0 : i32
    %c0_i32_0 = arith.constant 0 : i32
    %c0_i32_1 = arith.constant 0 : i32
    return %c0_i32, %c0_i32_0 : i32, i32
  }
  func.func @transform_2(%arg0: i32) -> (i32, i32) {
    %c0_i32 = arith.constant 0 : i32
    %c0_i32_0 = arith.constant 0 : i32
    %c0_i32_1 = arith.constant 0 : i32
    return %c0_i32, %c0_i32_0 : i32, i32
  }
  func.func @transform_3(%arg0: i32) -> (i32, i32) {
    %c0_i32 = arith.constant 0 : i32
    %c0_i32_0 = arith.constant 0 : i32
    %c0_i32_1 = arith.constant 0 : i32
    return %c0_i32, %c0_i32_0 : i32, i32
  }
  func.func @transform_4(%arg0: i32) -> (i32, i32) {
    %c0_i32 = arith.constant 0 : i32
    %c0_i32_0 = arith.constant 0 : i32
    %c0_i32_1 = arith.constant 0 : i32
    return %c0_i32, %c0_i32_0 : i32, i32
  }
  func.func @transform_5(%arg0: i32) -> (i32, i32) {
    %c0_i32 = arith.constant 0 : i32
    %c0_i32_0 = arith.constant 0 : i32
    return %arg0, %c0_i32 : i32, i32
  }
}

</mosaic_0001>

<llo_original>
// kernel: tpu_custom_call.1
$region0: #{tpu_custom_call.1}
  #allocation0 [shape = 'u32[]', space=smem, size = 0x4, offset = 0x4, fixed_abs, tag = 'smem constant byte address 0x4 - core index']
  #allocation1 [shape = 'u32[144,128]{1,0:T(1,128)}', space=vmem, size = 0x12000, scoped, tag = 'internal scratch']
  %s0 = inlined_call_operand.hbm [shape: bf16[16,32], index: 0, kind: input, shape index: {}]
  %s1 = inlined_call_operand.hbm [shape: bf16[32,128], index: 1, kind: input, shape index: {}]
  %s2 = inlined_call_operand.hbm [shape: f32[1,128], index: 2, kind: input, shape index: {}]
  %s3 = inlined_call_operand.hbm [shape: bf16[128,128], index: 3, kind: input, shape index: {}]
  %s4 = inlined_call_operand.hbm [shape: f32[1,128], index: 4, kind: input, shape index: {}]
  %s5 = inlined_call_operand.hbm [shape: f32[16,128], index: 5, kind: output, shape index: {}]
  %s6 = sld [smem:[#allocation0]]
  $region73: #{tpu_custom_call.1} parent=0
    _
  %s8 = ssub.s32 1, %s6
  %s9 = scalar_select 0, %s8, %s6
  $region1: #{tpu_custom_call.1} parent=0
    #allocation2 [shape = 'u8[4096]{0}', space=vmem, size = 0x1000, scoped, tag = 'input window, operand 0']
    #allocation3 [shape = 's32[2]{0}', space=sflag, size = 0x8, scoped, tag = 'scoped memory for tpu_custom_call.1']
    #allocation4 [shape = 's32[2]{0}', space=sflag, size = 0x8, scoped, tag = 'scoped memory for tpu_custom_call.1']
    #allocation5 [shape = 'u8[8192]{0}', space=vmem, size = 0x2000, scoped, tag = 'input window, operand 1, single buffered']
    #allocation6 [shape = 's32[1]{0}', space=sflag, size = 0x4, scoped, tag = 'scoped memory for tpu_custom_call.1']
    #allocation7 [shape = 'u8[512]{0}', space=vmem, size = 0x400, scoped, tag = 'input window, operand 2, single buffered']
    #allocation8 [shape = 'u8[32768]{0}', space=vmem, size = 0x8000, scoped, tag = 'input window, operand 3, single buffered']
    #allocation9 [shape = 's32[1]{0}', space=sflag, size = 0x4, scoped, tag = 'scoped memory for tpu_custom_call.1']
    #allocation10 [shape = 'u8[512]{0}', space=vmem, size = 0x400, scoped, tag = 'input window, operand 4, single buffered']
    #allocation11 [shape = 'u8[8192]{0}', space=vmem, size = 0x2000, scoped, tag = 'output window, operand 0']
    %10 = vsyncpa [#allocation3], 0
    %s11 = scalar_lea.sflag [#allocation3], 1
    %12 = vsyncpa %s11, 0
    %13 = vsyncpa [#allocation6], 0
    %14 = vsyncpa [#allocation9], 0
    %15 = vsyncpa [#allocation4], 0
    %s16 = scalar_lea.sflag [#allocation4], 1
    %17 = vsyncpa %s16, 0
    loop: start=0, step=1, limit=4
    $region2: #{tpu_custom_call.1} parent=1 // loop_pre_header
      _
    $region3: #{tpu_custom_call.1} parent=1 // loop_header
      %s19 = sphi 0, %s23
      %p20 = scmp.ge.s32.totalorder %s19, 4
      %s29 = sphi 0, %s31
      %s32 = sphi 0, %s29
      %s33 = sphi 0, %s32
      %s49 = sphi 0, %s33
      %s53 = sphi 0, %s53
      %s55 = sphi 0, %s53
      %s56 = sphi 0, %s55
      %s70 = sphi 0, %s56
      %s74 = sphi 0, %s74
      %s76 = sphi 0, %s74
      %s77 = sphi 0, %s76
      %s91 = sphi 0, %s77
      %s95 = sphi 0, %s95
      %s97 = sphi 0, %s95
      %s98 = sphi 0, %s97
      %s112 = sphi 0, %s98
      %s116 = sphi 0, %s116
      %s118 = sphi 0, %s116
      %s119 = sphi 0, %s118
      %s133 = sphi 0, %s119
      %s139 = sphi 0, %s141
      %s142 = sphi 0, %s139
      %s143 = sphi 0, %s142
      %s159 = sphi 0, %s143
    $region4: #{tpu_custom_call.1} parent=1 // loop_header_branch
      %22 = sbr.rel (%p20) target = $region8
    $region5: #{tpu_custom_call.1} parent=1 // loop_body
      %s24 = ssub.s32 %s19, 1
      %s25 = ssub.s32 %s19, 2
      %s26 = sadd.s32 %s19, 1
      %s27 = ssub.s32 %s19, %s26
      %p28 = scmp.eq.s32.totalorder %s27, 0
      %s30 = sadd.s32 %s29, 1
      %s31 = scalar_select %p28, %s29, %s30
      %p34 = pneg %p28
      %p35 = scmp.eq.s32.totalorder %s19, 1
      %p36 = por %p34, %p35
      %p37 = scmp.ne.s32.totalorder %s29, %s32
      %p38 = scmp.eq.s32.totalorder %s19, 0
      %p39 = por %p37, %p38
      %p40 = scmp.ne.s32.totalorder %s29, %s32
      %p41 = scmp.eq.s32.totalorder %s24, 1
      %p42 = por %p40, %p41
      %p43 = scmp.ne.s32.totalorder %s32, %s33
      %p44 = scmp.eq.s32.totalorder %s24, 0
      %p45 = por %p43, %p44
      %p46 = scmp.ne.s32.totalorder %s32, %s33
      %p47 = scmp.eq.s32.totalorder %s25, 1
      %p48 = por %p46, %p47
      %p50 = scmp.ne.s32.totalorder %s33, %s49
      %p51 = scmp.eq.s32.totalorder %s25, 0
      %p52 = por %p50, %p51
      %s54 = sadd.s32 %s53, 1
      %p57 = scmp.eq.s32.totalorder %s19, 1
      %p58 = scmp.ne.s32.totalorder %s53, %s55
      %p59 = scmp.eq.s32.totalorder %s19, 0
      %p60 = por %p58, %p59
      %p61 = scmp.ne.s32.totalorder %s53, %s55
      %p62 = scmp.eq.s32.totalorder %s24, 1
      %p63 = por %p61, %p62
      %p64 = scmp.ne.s32.totalorder %s55, %s56
      %p65 = scmp.eq.s32.totalorder %s24, 0
      %p66 = por %p64, %p65
      %p67 = scmp.ne.s32.totalorder %s55, %s56
      %p68 = scmp.eq.s32.totalorder %s25, 1
      %p69 = por %p67, %p68
      %p71 = scmp.ne.s32.totalorder %s56, %s70
      %p72 = scmp.eq.s32.totalorder %s25, 0
      %p73 = por %p71, %p72
      %s75 = sadd.s32 %s74, 1
      %p78 = scmp.eq.s32.totalorder %s19, 1
      %p79 = scmp.ne.s32.totalorder %s74, %s76
      %p80 = scmp.eq.s32.totalorder %s19, 0
      %p81 = por %p79, %p80
      %p82 = scmp.ne.s32.totalorder %s74, %s76
      %p83 = scmp.eq.s32.totalorder %s24, 1
      %p84 = por %p82, %p83
      %p85 = scmp.ne.s32.totalorder %s76, %s77
      %p86 = scmp.eq.s32.totalorder %s24, 0
      %p87 = por %p85, %p86
      %p88 = scmp.ne.s32.totalorder %s76, %s77
      %p89 = scmp.eq.s32.totalorder %s25, 1
      %p90 = por %p88, %p89
      %p92 = scmp.ne.s32.totalorder %s77, %s91
      %p93 = scmp.eq.s32.totalorder %s25, 0
      %p94 = por %p92, %p93
      %s96 = sadd.s32 %s95, 1
      %p99 = scmp.eq.s32.totalorder %s19, 1
      %p100 = scmp.ne.s32.totalorder %s95, %s97
      %p101 = scmp.eq.s32.totalorder %s19, 0
      %p102 = por %p100, %p101
      %p103 = scmp.ne.s32.totalorder %s95, %s97
      %p104 = scmp.eq.s32.totalorder %s24, 1
      %p105 = por %p103, %p104
      %p106 = scmp.ne.s32.totalorder %s97, %s98
      %p107 = scmp.eq.s32.totalorder %s24, 0
      %p108 = por %p106, %p107
      %p109 = scmp.ne.s32.totalorder %s97, %s98
      %p110 = scmp.eq.s32.totalorder %s25, 1
      %p111 = por %p109, %p110
      %p113 = scmp.ne.s32.totalorder %s98, %s112
      %p114 = scmp.eq.s32.totalorder %s25, 0
      %p115 = por %p113, %p114
      %s117 = sadd.s32 %s116, 1
      %p120 = scmp.eq.s32.totalorder %s19, 1
      %p121 = scmp.ne.s32.totalorder %s116, %s118
      %p122 = scmp.eq.s32.totalorder %s19, 0
      %p123 = por %p121, %p122
      %p124 = scmp.ne.s32.totalorder %s116, %s118
      %p125 = scmp.eq.s32.totalorder %s24, 1
      %p126 = por %p124, %p125
      %p127 = scmp.ne.s32.totalorder %s118, %s119
      %p128 = scmp.eq.s32.totalorder %s24, 0
      %p129 = por %p127, %p128
      %p130 = scmp.ne.s32.totalorder %s118, %s119
      %p131 = scmp.eq.s32.totalorder %s25, 1
      %p132 = por %p130, %p131
      %p134 = scmp.ne.s32.totalorder %s119, %s133
      %p135 = scmp.eq.s32.totalorder %s25, 0
      %p136 = por %p134, %p135
      %s137 = ssub.s32 %s19, %s26
      %p138 = scmp.eq.s32.totalorder %s137, 0
      %s140 = sadd.s32 %s139, 1
      %s141 = scalar_select %p138, %s139, %s140
      %p144 = pneg %p138
      %p145 = scmp.eq.s32.totalorder %s19, 1
      %p146 = por %p144, %p145
      %p147 = scmp.ne.s32.totalorder %s139, %s142
      %p148 = scmp.eq.s32.totalorder %s19, 0
      %p149 = por %p147, %p148
      %p150 = scmp.ne.s32.totalorder %s139, %s142
      %p151 = scmp.eq.s32.totalorder %s24, 1
      %p152 = por %p150, %p151
      %p153 = scmp.ne.s32.totalorder %s142, %s143
      %p154 = scmp.eq.s32.totalorder %s24, 0
      %p155 = por %p153, %p154
      %p156 = scmp.ne.s32.totalorder %s142, %s143
      %p157 = scmp.eq.s32.totalorder %s25, 1
      %p158 = por %p156, %p157
      %p160 = scmp.ne.s32.totalorder %s143, %s159
      %p161 = scmp.eq.s32.totalorder %s25, 0
      %p162 = por %p160, %p161
      %p163 = scmp.le.s32.totalorder 1, %s19
      %p164 = scmp.lt.s32.totalorder %s19, 3
      %p165 = pnand %p163, %p164
      %p166 = pneg %p165
      // Predicated region
      $region9: #{tpu_custom_call.1} parent=5 // pred_check
        _
      $region10: #{tpu_custom_call.1} parent=5 // pred_check_branch
        %168 = sbr.rel (%p165) target = $region12
      $region11: #{tpu_custom_call.1} parent=5 // pred_region
        %s169 = ssub.s32 %s19, 1
        // Predicated region
        $region13: #{tpu_custom_call.1} parent=11 // pred_check
          %p170 = pneg %p66
        $region14: #{tpu_custom_call.1} parent=11 // pred_check_branch
          %172 = sbr.rel (%p170) target = $region16
        $region15: #{tpu_custom_call.1} parent=11 // pred_region
          %s174 = ssub.s32 256, 256
          %175 = vsyncadd [#allocation6], %s174
          %s176 = sshll.u32 [#allocation5], 4
          %s177 = int_to_ptr.vmem [resolvable:$true] %s176
          %182 = dma.hbm_to_vmem [thread:$0]  %s1, 256, %s177, [#allocation6], 64, 64, 4
        $region16: #{tpu_custom_call.1} parent=11 // pred_fallthru
          _
        // Predicated region
        $region17: #{tpu_custom_call.1} parent=11 // pred_check
          %p183 = pneg %p87
        $region18: #{tpu_custom_call.1} parent=11 // pred_check_branch
          %185 = sbr.rel (%p183) target = $region20
        $region19: #{tpu_custom_call.1} parent=11 // pred_region
          %s187 = ssub.s32 16, 16
          %188 = vsyncadd [#allocation6], %s187
          %s190 = sshll.u32 [#allocation7], 4
          %s191 = int_to_ptr.vmem [resolvable:$true] %s190
          %193 = dma.hbm_to_vmem [thread:$0]  %s2, 16, %s191, [#allocation6]
        $region20: #{tpu_custom_call.1} parent=11 // pred_fallthru
          _
        // Predicated region
        $region21: #{tpu_custom_call.1} parent=11 // pred_check
          %p194 = pneg %p108
        $region22: #{tpu_custom_call.1} parent=11 // pred_check_branch
          %196 = sbr.rel (%p194) target = $region24
        $region23: #{tpu_custom_call.1} parent=11 // pred_region
          %s198 = ssub.s32 1024, 1024
          %199 = vsyncadd [#allocation9], %s198
          %s200 = sshll.u32 [#allocation8], 4
          %s201 = int_to_ptr.vmem [resolvable:$true] %s200
          %206 = dma.hbm_to_vmem [thread:$0]  %s3, 1024, %s201, [#allocation9], 64, 64, 4
        $region24: #{tpu_custom_call.1} parent=11 // pred_fallthru
          _
        // Predicated region
        $region25: #{tpu_custom_call.1} parent=11 // pred_check
          %p207 = pneg %p129
        $region26: #{tpu_custom_call.1} parent=11 // pred_check_branch
          %209 = sbr.rel (%p207) target = $region28
        $region27: #{tpu_custom_call.1} parent=11 // pred_region
          %s211 = ssub.s32 16, 16
          %212 = vsyncadd [#allocation9], %s211
          %s214 = sshll.u32 [#allocation10], 4
          %s215 = int_to_ptr.vmem [resolvable:$true] %s214
          %217 = dma.hbm_to_vmem [thread:$0]  %s4, 16, %s215, [#allocation9]
        $region28: #{tpu_custom_call.1} parent=11 // pred_fallthru
          _
      $region12: #{tpu_custom_call.1} parent=5 // pred_fallthru
        _
      %p218 = scmp.lt.s32.totalorder %s19, 2
      // Predicated region
      $region29: #{tpu_custom_call.1} parent=5 // pred_check
        %p219 = pneg %p218
      $region30: #{tpu_custom_call.1} parent=5 // pred_check_branch
        %221 = sbr.rel (%p219) target = $region32
      $region31: #{tpu_custom_call.1} parent=5 // pred_region
        // Predicated region
        $region33: #{tpu_custom_call.1} parent=31 // pred_check
          %p222 = pneg %p39
        $region34: #{tpu_custom_call.1} parent=31 // pred_check_branch
          %224 = sbr.rel (%p222) target = $region36
        $region35: #{tpu_custom_call.1} parent=31 // pred_region
          %s225 = sand.u32 %s29, 1
          %s226 = scalar_lea.sflag [#allocation3], %s225
          %s227 = sand.u32 %s29, 1
          %s228 = smul.addr %s227, 4
          %s229 = scalar_lea.vmem [#allocation2], %s228
          %s231 = ssub.s32 64, 64
          %232 = vsyncadd %s226, %s231
          %s233 = smul.addr %s19, 64
          %s234 = scalar_lea.hbm %s0, %s233
          %s236 = sshll.u32 %s229, 4
          %s237 = int_to_ptr.vmem [resolvable:$true] %s236
          %239 = dma.hbm_to_vmem [thread:$0]  %s234, 64, %s237, %s226
        $region36: #{tpu_custom_call.1} parent=31 // pred_fallthru
          _
      $region32: #{tpu_custom_call.1} parent=5 // pred_fallthru
        _
      %p240 = scmp.le.s32.totalorder 1, %s19
      %p241 = scmp.lt.s32.totalorder %s19, 3
      %p242 = pnand %p240, %p241
      %p243 = pneg %p242
      // Predicated region
      $region37: #{tpu_custom_call.1} parent=5 // pred_check
        _
      $region38: #{tpu_custom_call.1} parent=5 // pred_check_branch
        %245 = sbr.rel (%p242) target = $region40
      $region39: #{tpu_custom_call.1} parent=5 // pred_region
        %s246 = ssub.s32 %s19, 1
        %s247 = sand.u32 %s32, 1
        %s248 = scalar_lea.sflag [#allocation3], %s247
        %s249 = sand.u32 %s32, 1
        %s250 = smul.addr %s249, 4
        %s251 = scalar_lea.vmem [#allocation2], %s250
        // Predicated region
        $region41: #{tpu_custom_call.1} parent=39 // pred_check
          %p252 = pneg %p45
        $region42: #{tpu_custom_call.1} parent=39 // pred_check_branch
          %254 = sbr.rel (%p252) target = $region44
        $region43: #{tpu_custom_call.1} parent=39 // pred_region
          %255 = dma.done %s248, 64
        $region44: #{tpu_custom_call.1} parent=39 // pred_fallthru
          _
        // Predicated region
        $region45: #{tpu_custom_call.1} parent=39 // pred_check
          %p256 = pneg %p66
        $region46: #{tpu_custom_call.1} parent=39 // pred_check_branch
          %258 = sbr.rel (%p256) target = $region48
        $region47: #{tpu_custom_call.1} parent=39 // pred_region
          %259 = dma.done [#allocation6], 256
        $region48: #{tpu_custom_call.1} parent=39 // pred_fallthru
          _
        // Predicated region
        $region49: #{tpu_custom_call.1} parent=39 // pred_check
          %p260 = pneg %p87
        $region50: #{tpu_custom_call.1} parent=39 // pred_check_branch
          %262 = sbr.rel (%p260) target = $region52
        $region51: #{tpu_custom_call.1} parent=39 // pred_region
          %263 = dma.done [#allocation6], 16
        $region52: #{tpu_custom_call.1} parent=39 // pred_fallthru
          _
        // Predicated region
        $region53: #{tpu_custom_call.1} parent=39 // pred_check
          %p264 = pneg %p108
        $region54: #{tpu_custom_call.1} parent=39 // pred_check_branch
          %266 = sbr.rel (%p264) target = $region56
        $region55: #{tpu_custom_call.1} parent=39 // pred_region
          %267 = dma.done [#allocation9], 1024
        $region56: #{tpu_custom_call.1} parent=39 // pred_fallthru
          _
        // Predicated region
        $region57: #{tpu_custom_call.1} parent=39 // pred_check
          %p268 = pneg %p129
        $region58: #{tpu_custom_call.1} parent=39 // pred_check_branch
          %270 = sbr.rel (%p268) target = $region60
        $region59: #{tpu_custom_call.1} parent=39 // pred_region
          %271 = dma.done [#allocation9], 16
        $region60: #{tpu_custom_call.1} parent=39 // pred_fallthru
          _
        %s272 = sand.u32 %s32, 1
        %s273 = scalar_lea.sflag [#allocation3], %s272
        %s274 = sand.u32 %s32, 1
        %s275 = smul.addr %s274, 4
        %s276 = scalar_lea.vmem [#allocation2], %s275
        %p277 = pneg %p45
        %p278 = pneg %p42
        %p279 = pneg %p66
        %p280 = pneg %p63
        %p281 = pneg %p87
        %p282 = pneg %p84
        %p283 = pneg %p108
        %p284 = pneg %p105
        %p285 = pneg %p129
        %p286 = pneg %p126
        %p287 = pneg %p155
        %p288 = pneg %p152
        %s289 = sand.u32 %s142, 1
        %s290 = scalar_lea.sflag [#allocation4], %s289
        %s291 = sand.u32 %s142, 1
        %s292 = smul.addr %s291, 8
        %s293 = scalar_lea.vmem [#allocation11], %s292
        %v295 = vld [vmem:[%s251] sm:$0xf]
        %v296 = vld [vmem:[#allocation5] sm:$0xf]
        %v297 = vld [vmem:[#allocation5 + $0x4] sm:$0xf]
        %v298 = vld [vmem:[#allocation5 + $0x8] sm:$0xf]
        %v299 = vld [vmem:[#allocation5 + $0xc] sm:$0xf]
        %v300 = vld [vmem:[#allocation7] sm:$0x1]
        %v302 = vlaneseq
        %v303 = vshrl.u32 %v302, 7
        %v304 = vsub.s32 0, %v303
        %v305 = vrot.slane %v300, %v304
        %v311 = vunpack.c.l.b16 %v296
        %v312 = vunpack.c.l.b16 %v297
        %v313 = vunpack.c.l.b16 %v298
        %v314 = vunpack.c.l.b16 %v299
        %v315 = vpack.c.b16 %v312, %v311
        %v316 = vpack.c.b16 %v314, %v313
        %vm319 = vcmask 261120
        %v321 = vsel %vm319, %v295, 0
        %323 = vmatprep.subr.bf16.mxu0 0
        %324 = vmatpush1.bf16.msra.mxu0 %v315
        %325 = vmatprep.subr.bf16.mxu0 0
        %326 = vmatpush1.bf16.msra.mxu0 %v316
        %327 = vmatprep.subr.bf16.mxu0 0
        %328 = vmatpush1.bf16.msra.mxu0 0
        %329 = vmatprep.subr.bf16.mxu0 0
        %330 = vmatpush1.bf16.msra.mxu0 0
        %331 = vmatprep.subr.bf16.mxu0 0
        %332 = vmatpush1.bf16.msra.mxu0 0
        %333 = vmatprep.subr.bf16.mxu0 0
        %334 = vmatpush1.bf16.msra.mxu0 0
        %335 = vmatprep.subr.bf16.mxu0 0
        %336 = vmatpush1.bf16.msra.mxu0 0
        %337 = vmatprep.subr.bf16.mxu0 0
        %338 = vmatpush1.bf16.msra.mxu0 0
        %339 = vmatprep.subr.bf16.mxu0 0
        %340 = vmatpush1.bf16.msra.mxu0 0
        %341 = vmatprep.subr.bf16.mxu0 0
        %342 = vmatpush1.bf16.msra.mxu0 0
        %343 = vmatprep.subr.bf16.mxu0 0
        %344 = vmatpush1.bf16.msra.mxu0 0
        %345 = vmatprep.subr.bf16.mxu0 0
        %346 = vmatpush1.bf16.msra.mxu0 0
        %347 = vmatprep.subr.bf16.mxu0 0
        %348 = vmatpush1.bf16.msra.mxu0 0
        %349 = vmatprep.subr.bf16.mxu0 0
        %350 = vmatpush1.bf16.msra.mxu0 0
        %351 = vmatprep.subr.bf16.mxu0 0
        %352 = vmatpush1.bf16.msra.mxu0 0
        %353 = vmatprep.subr.bf16.mxu0 0
        %354 = vmatpush1.bf16.msra.mxu0 0
        %355 = vmatprep.mubr.bf16.mxu0 0
        %356 = vmatmul.mubr.bf16.gmra.mrb[0].mxu0 %v321
        %v357 = vpop.f32.mrb[0].mxu0
        %v358 = vadd.f32 %v305, %v357
        %v359 = vpop.f32.mrb[0].mxu0
        %v360 = vpop.f32.mrb[0].mxu0
        %v361 = vpop.f32.mrb[0].mxu0
        %362 = vdwg.mxu0
        %v363 = vmul.f32 %v358, 0.5
        %v364 = vmul.f32 %v358, 0.70710677
        %v365 = verf.f32.pop %v364
        %v366 = vadd.f32 %v365, 1.0
        %v367 = vmul.f32 %v363, %v366
        %v368 = vpack.c.bf16 %v367, %v367
        %v369 = vld [vmem:[#allocation8] sm:$0xf]
        %v370 = vld [vmem:[#allocation8 + $0x4] sm:$0xf]
        %v371 = vld [vmem:[#allocation8 + $0x8] sm:$0xf]
        %v372 = vld [vmem:[#allocation8 + $0xc] sm:$0xf]
        %v373 = vld [vmem:[#allocation8 + $0x10] sm:$0xf]
        %v374 = vld [vmem:[#allocation8 + $0x14] sm:$0xf]
        %v375 = vld [vmem:[#allocation8 + $0x18] sm:$0xf]
        %v376 = vld [vmem:[#allocation8 + $0x1c] sm:$0xf]
        %v377 = vld [vmem:[#allocation8 + $0x20] sm:$0xf]
        %v378 = vld [vmem:[#allocation8 + $0x24] sm:$0xf]
        %v379 = vld [vmem:[#allocation8 + $0x28] sm:$0xf]
        %v380 = vld [vmem:[#allocation8 + $0x2c] sm:$0xf]
        %v381 = vld [vmem:[#allocation8 + $0x30] sm:$0xf]
        %v382 = vld [vmem:[#allocation8 + $0x34] sm:$0xf]
        %v383 = vld [vmem:[#allocation8 + $0x38] sm:$0xf]
        %v384 = vld [vmem:[#allocation8 + $0x3c] sm:$0xf]
        %v385 = vld [vmem:[#allocation10] sm:$0x1]
        %v387 = vlaneseq
        %v388 = vshrl.u32 %v387, 7
        %v389 = vsub.s32 0, %v388
        %v390 = vrot.slane %v385, %v389
        %v408 = vunpack.c.l.b16 %v369
        %v409 = vunpack.c.l.b16 %v370
        %v410 = vunpack.c.l.b16 %v371
        %v411 = vunpack.c.l.b16 %v372
        %v412 = vunpack.c.l.b16 %v373
        %v413 = vunpack.c.l.b16 %v374
        %v414 = vunpack.c.l.b16 %v375
        %v415 = vunpack.c.l.b16 %v376
        %v416 = vunpack.c.l.b16 %v377
        %v417 = vunpack.c.l.b16 %v378
        %v418 = vunpack.c.l.b16 %v379
        %v419 = vunpack.c.l.b16 %v380
        %v420 = vunpack.c.l.b16 %v381
        %v421 = vunpack.c.l.b16 %v382
        %v422 = vunpack.c.l.b16 %v383
        %v423 = vunpack.c.l.b16 %v384
        %v424 = vpack.c.b16 %v409, %v408
        %v425 = vpack.c.b16 %v411, %v410
        %v426 = vpack.c.b16 %v413, %v412
        %v427 = vpack.c.b16 %v415, %v414
        %v428 = vpack.c.b16 %v417, %v416
        %v429 = vpack.c.b16 %v419, %v418
        %v430 = vpack.c.b16 %v421, %v420
        %v431 = vpack.c.b16 %v423, %v422
        %440 = vmatprep.subr.bf16.mxu0 0
        %441 = vmatpush1.bf16.msra.mxu0 %v424
        %442 = vmatprep.subr.bf16.mxu0 0
        %443 = vmatpush1.bf16.msra.mxu0 %v425
        %444 = vmatprep.subr.bf16.mxu0 0
        %445 = vmatpush1.bf16.msra.mxu0 %v426
        %446 = vmatprep.subr.bf16.mxu0 0
        %447 = vmatpush1.bf16.msra.mxu0 %v427
        %448 = vmatprep.subr.bf16.mxu0 0
        %449 = vmatpush1.bf16.msra.mxu0 %v428
        %450 = vmatprep.subr.bf16.mxu0 0
        %451 = vmatpush1.bf16.msra.mxu0 %v429
        %452 = vmatprep.subr.bf16.mxu0 0
        %453 = vmatpush1.bf16.msra.mxu0 %v430
        %454 = vmatprep.subr.bf16.mxu0 0
        %455 = vmatpush1.bf16.msra.mxu0 %v431
        %456 = vmatprep.subr.bf16.mxu0 0
        %457 = vmatpush1.bf16.msra.mxu0 0
        %458 = vmatprep.subr.bf16.mxu0 0
        %459 = vmatpush1.bf16.msra.mxu0 0
        %460 = vmatprep.subr.bf16.mxu0 0
        %461 = vmatpush1.bf16.msra.mxu0 0
        %462 = vmatprep.subr.bf16.mxu0 0
        %463 = vmatpush1.bf16.msra.mxu0 0
        %464 = vmatprep.subr.bf16.mxu0 0
        %465 = vmatpush1.bf16.msra.mxu0 0
        %466 = vmatprep.subr.bf16.mxu0 0
        %467 = vmatpush1.bf16.msra.mxu0 0
        %468 = vmatprep.subr.bf16.mxu0 0
        %469 = vmatpush1.bf16.msra.mxu0 0
        %470 = vmatprep.subr.bf16.mxu0 0
        %471 = vmatpush1.bf16.msra.mxu0 0
        %472 = vmatprep.mubr.bf16.mxu0 0
        %473 = vmatmul.mubr.bf16.gmra.mrb[0].mxu0 %v368
        %v474 = vpop.f32.mrb[0].mxu0
        %v475 = vadd.f32 %v390, %v474
        %v476 = vpop.f32.mrb[0].mxu0
        %v477 = vpop.f32.mrb[0].mxu0
        %v478 = vpop.f32.mrb[0].mxu0
        %479 = vdwg.mxu0
        %480 = vst [vmem:[%s293] sm:$0xff] %v475
        %s481 = sand.u32 %s142, 1
        %s482 = scalar_lea.sflag [#allocation4], %s481
        %s483 = sand.u32 %s142, 1
        %s484 = smul.addr %s483, 8
        %s485 = scalar_lea.vmem [#allocation11], %s484
        // Predicated region
        $region61: #{tpu_custom_call.1} parent=39 // pred_check
          %p486 = pneg %p152
        $region62: #{tpu_custom_call.1} parent=39 // pred_check_branch
          %488 = sbr.rel (%p486) target = $region64
        $region63: #{tpu_custom_call.1} parent=39 // pred_region
          %s490 = ssub.s32 128, 128
          %491 = vsyncadd %s482, %s490
          %s492 = smul.addr %s24, 128
          %s493 = scalar_lea.hbm %s5, %s492
          %s495 = sshll.u32 %s485, 4
          %s496 = int_to_ptr.vmem [resolvable:$true] %s495
          %498 = dma.vmem_to_hbm [thread:$0]  %s496, 128, %s493, %s482
        $region64: #{tpu_custom_call.1} parent=39 // pred_fallthru
          _
      $region40: #{tpu_custom_call.1} parent=5 // pred_fallthru
        _
      %p499 = scmp.le.s32.totalorder 2, %s19
      // Predicated region
      $region65: #{tpu_custom_call.1} parent=5 // pred_check
        %p500 = pneg %p499
      $region66: #{tpu_custom_call.1} parent=5 // pred_check_branch
        %502 = sbr.rel (%p500) target = $region68
      $region67: #{tpu_custom_call.1} parent=5 // pred_region
        %s503 = ssub.s32 %s19, 2
        // Predicated region
        $region69: #{tpu_custom_call.1} parent=67 // pred_check
          %p504 = pneg %p158
        $region70: #{tpu_custom_call.1} parent=67 // pred_check_branch
          %506 = sbr.rel (%p504) target = $region72
        $region71: #{tpu_custom_call.1} parent=67 // pred_region
          %s507 = sand.u32 %s143, 1
          %s508 = scalar_lea.sflag [#allocation4], %s507
          %s509 = sand.u32 %s143, 1
          %s510 = smul.addr %s509, 8
          %s511 = scalar_lea.vmem [#allocation11], %s510
          %512 = dma.done %s508, 128
        $region72: #{tpu_custom_call.1} parent=67 // pred_fallthru
          _
      $region68: #{tpu_custom_call.1} parent=5 // pred_fallthru
        _
    $region6: #{tpu_custom_call.1} parent=1 // loop_footer
      %s23 = sadd.s32 1, %s19
    $region7: #{tpu_custom_call.1} parent=1 // loop_footer_branch
      %18 = sbr.rel target = $region3
    $region8: #{tpu_custom_call.1} parent=1 // loop_exit
      _
    %513 = vsyncpa [#allocation3], 1
    %s514 = scalar_lea.sflag [#allocation3], 1
    %515 = vsyncpa %s514, 1
    %516 = vsyncpa [#allocation6], 1
    %517 = vsyncpa [#allocation9], 1
    %518 = vsyncpa [#allocation4], 1
    %s519 = scalar_lea.sflag [#allocation4], 1
    %520 = vsyncpa %s519, 1

</llo_original>
